<compile_context>
chip_gen: v6e
topology: v6e:2x2x1
jax: 0.10.0
libtpu: 0.0.40
codegen_flags: <defaults>
</compile_context>

<pallas_src>
import functools

import jax
import jax.numpy as jnp
from jax.experimental import pallas as pl
from jax.experimental.pallas import tpu as pltpu

_LANES = 128
_SUBLANES = 8
_SMALL_N_MAX = 1024                   # <= a vreg's worth -> single-block path
_VMEM_LIMIT_BYTES = 32 * 1024 * 1024  # safe on v5e/v6e/v7x


def _round_up(x, m):
    return -(-x // m) * m


# --------------------------- tiny-input path (grid = 1) ---------------------------

def _mae_loss_small_kernel(tok_ref, pre_ref, out_ref, *,
                           static_normalizer, normalize_length):
    tok = tok_ref[...].astype(jnp.float32)      # (1, n)
    pre = pre_ref[...].astype(jnp.float32)
    abs_sum = jnp.sum(jnp.abs(tok - pre))
    if normalize_length:
        normalizer = jnp.sum(tok)
    else:
        normalizer = jnp.float32(static_normalizer)
    out_ref[0] = abs_sum / normalizer           # single SMEM scalar store


def _mae_loss_small(tok2d, pre2d, n, batch_size, normalize_length, itemsize):
    kernel = functools.partial(_mae_loss_small_kernel,
                               static_normalizer=batch_size,
                               normalize_length=normalize_length)
    out = pl.pallas_call(
        kernel,
        out_shape=jax.ShapeDtypeStruct((1,), jnp.float32),
        grid_spec=pltpu.PrefetchScalarGridSpec(
            num_scalar_prefetch=0,
            grid=(1,),
            in_specs=[
                pl.BlockSpec((1, n), lambda i: (0, 0)),   # full-extent block
                pl.BlockSpec((1, n), lambda i: (0, 0)),
            ],
            out_specs=pl.BlockSpec(memory_space=pltpu.SMEM),
        ),
        compiler_params=pltpu.CompilerParams(
            dimension_semantics=("arbitrary",)),
        cost_estimate=pl.CostEstimate(
            flops=4 * n, transcendentals=0,
            bytes_accessed=2 * n * itemsize + 4),
    )(tok2d, pre2d)
    return out[0]


# --------------------------- large-input tiled path ---------------------------

def _mae_loss_tiled_kernel(tok_ref, pre_ref, abs_acc_ref, tok_acc_ref, *,
                           rows, tile_r, steps_per_split,
                           normalize_length, need_mask):
    s = pl.program_id(0)   # core / split axis ("parallel")
    i = pl.program_id(1)   # row-tile reduction axis ("arbitrary")

    @pl.when(i == 0)
    def _():
        abs_acc_ref[...] = jnp.zeros_like(abs_acc_ref)
        tok_acc_ref[...] = jnp.zeros_like(tok_acc_ref)

    tok = tok_ref[...].astype(jnp.float32)      # (tile_r, 128)
    pre = pre_ref[...].astype(jnp.float32)

    if need_mask:
        # Row mask for the ragged last block and for clamped duplicate blocks
        # (the index_map clamps logical blocks that run past the array).
        row0 = (s * steps_per_split + i) * tile_r
        row_ids = row0 + jax.lax.broadcasted_iota(jnp.int32, (tile_r, _LANES), 0)
        valid = row_ids < rows
        tok = jnp.where(valid, tok, 0.0)
        pre = jnp.where(valid, pre, 0.0)

    diff = jnp.abs(tok - pre)
    # Pure-VPU accumulation into an (8,128) vreg slab: no per-step cross-lane
    # reduce, no SMEM scalar RMW.  Final scalar reduce happens in the wrapper.
    abs_acc_ref[0] += jnp.sum(
        diff.reshape(tile_r // _SUBLANES, _SUBLANES, _LANES), axis=0)
    if normalize_length:
        tok_acc_ref[0] += jnp.sum(
            tok.reshape(tile_r // _SUBLANES, _SUBLANES, _LANES), axis=0)


def _mae_loss_tiled(tok2d, pre2d, rows, n, batch_size, normalize_length,
                    tile_rows, itemsize):
    # Tile rows: as big as requested, but never larger than the array
    # (and always a multiple of 8 sublanes).
    tile_r = max(_SUBLANES, min(tile_rows, (rows // _SUBLANES) * _SUBLANES))
    total_steps = pl.cdiv(rows, tile_r)
    # Split across 2 TensorCores (v7x) when there is enough work; on
    # single-TC chips the extra split just runs serially.
    n_splits = 2 if total_steps >= 4 else 1
    steps_per_split = pl.cdiv(total_steps, n_splits)
    need_mask = (n_splits * steps_per_split * tile_r) != rows
    last_block = total_steps - 1

    def in_index_map(s, i):
        # Clamp logical blocks that run past the array; the in-kernel row
        # mask zeroes any re-read contributions.
        return (jnp.minimum(s * steps_per_split + i, last_block), 0)

    kernel = functools.partial(
        _mae_loss_tiled_kernel,
        rows=rows, tile_r=tile_r, steps_per_split=steps_per_split,
        normalize_length=normalize_length, need_mask=need_mask)

    acc_shape = jax.ShapeDtypeStruct((n_splits, _SUBLANES, _LANES), jnp.float32)
    abs_parts, tok_parts = pl.pallas_call(
        kernel,
        out_shape=(acc_shape, acc_shape),
        grid_spec=pltpu.PrefetchScalarGridSpec(
            num_scalar_prefetch=0,
            grid=(n_splits, steps_per_split),
            in_specs=[
                pl.BlockSpec((tile_r, _LANES), in_index_map),
                pl.BlockSpec((tile_r, _LANES), in_index_map),
            ],
            out_specs=[
                pl.BlockSpec((1, _SUBLANES, _LANES), lambda s, i: (s, 0, 0)),
                pl.BlockSpec((1, _SUBLANES, _LANES), lambda s, i: (s, 0, 0)),
            ],
        ),
        compiler_params=pltpu.CompilerParams(
            dimension_semantics=("parallel", "arbitrary"),
            vmem_limit_bytes=_VMEM_LIMIT_BYTES),
        cost_estimate=pl.CostEstimate(
            flops=4 * n, transcendentals=0,
            bytes_accessed=2 * n * itemsize
            + 2 * n_splits * _SUBLANES * _LANES * 4),
    )(tok2d, pre2d)

    # Tiny epilogue: combine per-split vreg accumulators and divide.
    abs_sum = jnp.sum(abs_parts)
    if normalize_length:
        normalizer = jnp.sum(tok_parts)
    else:
        normalizer = jnp.float32(batch_size)
    return abs_sum / normalizer


# --------------------------------- public API ---------------------------------

def mae_loss(token_length, pre_token_length, normalize_length=False,
             tile_rows=4096):
    """Pallas TPU implementation of mae_loss.forward.

    token_length, pre_token_length: same shape; first dim is the batch dim.
    Returns a scalar float32 loss.
    """
    assert token_length.shape == pre_token_length.shape
    assert token_length.ndim >= 1, "token_length must have a batch dim (size(0))"
    assert tile_rows % _SUBLANES == 0 and tile_rows > 0
    batch_size = int(token_length.shape[0])
    n = int(token_length.size)
    itemsize = int(token_length.dtype.itemsize)

    tok_flat = jnp.reshape(token_length, (-1,))
    pre_flat = jnp.reshape(pre_token_length, (-1,))

    if n <= _SMALL_N_MAX:
        # (1, n) reshape is metadata-only; no pad, single grid step.
        return _mae_loss_small(jnp.reshape(tok_flat, (1, n)),
                               jnp.reshape(pre_flat, (1, n)),
                               n, batch_size, normalize_length, itemsize)

    n128 = _round_up(n, _LANES)
    if n128 != n:
        # TODO(synk): only remaining copy path; zero-copy ragged handling
        # would need a memory_space=pl.ANY input + manual masked tail DMA.
        pad = n128 - n
        tok_flat = jnp.pad(tok_flat, (0, pad))
        pre_flat = jnp.pad(pre_flat, (0, pad))
    rows = n128 // _LANES
    tok2d = jnp.reshape(tok_flat, (rows, _LANES))   # free when n % 128 == 0
    pre2d = jnp.reshape(pre_flat, (rows, _LANES))
    return _mae_loss_tiled(tok2d, pre2d, rows, n, batch_size,
                           normalize_length, tile_rows, itemsize)


# ----------------------------------- tests -----------------------------------

def _ref_mae_loss(token_length, pre_token_length, normalize_length=False):
    tok = token_length.astype(jnp.float32)
    pre = pre_token_length.astype(jnp.float32)
    norm = jnp.sum(tok) if normalize_length else jnp.float32(tok.shape[0])
    return jnp.sum(jnp.abs(tok - pre)) / norm


if __name__ == "__main__":
    key = jax.random.PRNGKey(0)
    keys = jax.random.split(key, 8)

    # --- Canonical tiny case: per-utterance token counts, B=8 (small path) ---
    batch = 8
    token_length = jax.random.randint(keys[0], (batch,), 1, 20).astype(jnp.float32)
    pre_token_length = token_length + jax.random.normal(keys[1], (batch,), jnp.float32)
    for norm_flag in (False, True):
        got = jax.block_until_ready(
            mae_loss(token_length, pre_token_length, normalize_length=norm_flag))
        want = _ref_mae_loss(token_length, pre_token_length, normalize_length=norm_flag)
        assert jnp.allclose(got, want, rtol=1e-6, atol=1e-6), (norm_flag, got, want)

    # --- Tiled path, n % 128 == 0 (no pad), 2-way core split, no mask ---
    n1 = 4096
    tok1 = jax.random.randint(keys[2], (n1,), 1, 20).astype(jnp.float32)
    pre1 = tok1 + jax.random.normal(keys[3], (n1,), jnp.float32)
    got1 = jax.block_until_ready(mae_loss(tok1, pre1, normalize_length=True, tile_rows=8))
    want1 = _ref_mae_loss(tok1, pre1, normalize_length=True)
    assert jnp.allclose(got1, want1, rtol=1e-5, atol=1e-5), (got1, want1)

    # --- Tiled path, ragged n (pad + row mask + clamped 2-way split) ---
    n2 = 5000
    tok2 = jax.random.randint(keys[4], (n2,), 1, 20).astype(jnp.float32)
    pre2 = tok2 + jax.random.normal(keys[5], (n2,), jnp.float32)
    for norm_flag in (False, True):
        got2 = jax.block_until_ready(
            mae_loss(tok2, pre2, normalize_length=norm_flag, tile_rows=8))
        want2 = _ref_mae_loss(tok2, pre2, normalize_length=norm_flag)
        assert jnp.allclose(got2, want2, rtol=1e-5, atol=1e-5), (norm_flag, got2, want2)

    # --- Tiled path with the default (large) tile size ---
    n3 = 2048
    tok3 = jax.random.randint(keys[6], (n3,), 1, 20).astype(jnp.float32)
    pre3 = tok3 + jax.random.normal(keys[7], (n3,), jnp.float32)
    got3 = jax.block_until_ready(mae_loss(tok3, pre3, normalize_length=True))
    want3 = _ref_mae_loss(tok3, pre3, normalize_length=True)
    assert jnp.allclose(got3, want3, rtol=1e-5, atol=1e-5), (got3, want3)

    print("KERNEL_OK")
</pallas_src>

<mosaic_0001>
module attributes {stable_mosaic.version = 11 : i64} {
  func.func @_mae_loss_small_kernel(%arg0: i32, %arg1: memref<1x8xf32, #tpu.memory_space<vmem>>, %arg2: memref<1x8xf32, #tpu.memory_space<vmem>>, %arg3: memref<1xf32, #tpu.memory_space<smem>>) attributes {dimension_semantics = [#tpu.dimension_semantics<arbitrary>], iteration_bounds = array<i64: 1>, scalar_prefetch = 0 : i64, scratch_operands = 0 : i64, tpu.core_type = #tpu.core_type<tc>, window_params = [{pipeline_mode = #tpu.pipeline_mode<synchronous>, transform_indices = @transform_0, window_bounds = array<i64: 1, 8>}, {pipeline_mode = #tpu.pipeline_mode<synchronous>, transform_indices = @transform_1, window_bounds = array<i64: 1, 8>}, {transform_indices = @transform_2, window_bounds = array<i64: 1>}]} {
    %c0 = arith.constant 0 : index
    %c0_0 = arith.constant 0 : index
    %0 = vector.load %arg1[%c0, %c0_0] : memref<1x8xf32, #tpu.memory_space<vmem>>, vector<1x8xf32>
    %c0_1 = arith.constant 0 : index
    %c0_2 = arith.constant 0 : index
    %1 = vector.load %arg2[%c0_1, %c0_2] : memref<1x8xf32, #tpu.memory_space<vmem>>, vector<1x8xf32>
    %2 = arith.subf %0, %1 : vector<1x8xf32>
    %3 = math.absf %2 : vector<1x8xf32>
    %4 = vector.shape_cast %3 : vector<1x8xf32> to vector<1x1x8xf32>
    %cst = arith.constant dense<0.000000e+00> : vector<1xf32>
    %5 = vector.multi_reduction <add>, %4, %cst [1, 2] : vector<1x1x8xf32> to vector<1xf32>
    %6 = vector.shape_cast %5 : vector<1xf32> to vector<1x1x1xf32>
    %7 = vector.extract %6[0, 0, 0] : f32 from vector<1x1x1xf32>
    %cst_3 = arith.constant 8.000000e+00 : f32
    %8 = arith.divf %7, %cst_3 : f32
    %c0_4 = arith.constant 0 : index
    %9 = memref.load %arg3[%c0_4] : memref<1xf32, #tpu.memory_space<smem>>
    memref.store %8, %arg3[%c0_4] : memref<1xf32, #tpu.memory_space<smem>>
    return
  }
  func.func @transform_0(%arg0: i32) -> (i32, i32) {
    %c0_i32 = arith.constant 0 : i32
    %c0_i32_0 = arith.constant 0 : i32
    %c0_i32_1 = arith.constant 0 : i32
    return %c0_i32, %c0_i32_0 : i32, i32
  }
  func.func @transform_1(%arg0: i32) -> (i32, i32) {
    %c0_i32 = arith.constant 0 : i32
    %c0_i32_0 = arith.constant 0 : i32
    %c0_i32_1 = arith.constant 0 : i32
    return %c0_i32, %c0_i32_0 : i32, i32
  }
  func.func @transform_2(%arg0: i32) -> i32 {
    %c0_i32 = arith.constant 0 : i32
    %c0_i32_0 = arith.constant 0 : i32
    return %c0_i32 : i32
  }
}

</mosaic_0001>

<llo_original>
// kernel: tpu_custom_call.1
$region0: #{tpu_custom_call.1}
  #allocation0 [shape = 'u32[]', space=smem, size = 0x4, offset = 0x4, fixed_abs, tag = 'smem constant byte address 0x4 - core index']
  #allocation1 [shape = 'u32[144,128]{1,0:T(1,128)}', space=vmem, size = 0x12000, scoped, tag = 'internal scratch']
  %s0 = inlined_call_operand.hbm [shape: f32[1,8], index: 0, kind: input, shape index: {}]
  %s1 = inlined_call_operand.vmem [shape: f32[1,8], index: 1, kind: input, shape index: {}]
  %s2 = inlined_call_operand.hbm [shape: f32[1], index: 2, kind: output, shape index: {}]
  %s3 = sld [smem:[#allocation0]]
  $region22: #{tpu_custom_call.1} parent=0
    _
  %s5 = ssub.s32 1, %s3
  %s6 = scalar_select 0, %s5, %s3
  $region1: #{tpu_custom_call.1} parent=0
    #allocation2 [shape = 'u8[512]{0}', space=vmem, size = 0x400, scoped, tag = 'input window, operand 0, single buffered']
    #allocation3 [shape = 's32[1]{0}', space=sflag, size = 0x4, scoped, tag = 'scoped memory for tpu_custom_call.1']
    #allocation4 [shape = 's32[1]{0}', space=sflag, size = 0x4, scoped, tag = 'scoped memory for tpu_custom_call.1']
    #allocation5 [shape = 'u8[512]{0}', space=smem, size = 0x200, scoped, tag = 'output window, operand 0, single buffered']
    %7 = vsyncpa [#allocation3], 0
    %8 = vsyncpa [#allocation4], 0
    // Predicated region
    $region2: #{tpu_custom_call.1} parent=1 // pred_check
      _
    $region3: #{tpu_custom_call.1} parent=1 // pred_check_branch
      %10 = sbr.rel (0) target = $region5
    $region4: #{tpu_custom_call.1} parent=1 // pred_region
      %s12 = ssub.s32 16, 16
      %13 = vsyncadd [#allocation3], %s12
      %s15 = sshll.u32 [#allocation2], 4
      %s16 = int_to_ptr.vmem [resolvable:$true] %s15
      %18 = dma.hbm_to_vmem [thread:$0]  %s0, 16, %s16, [#allocation3]
    $region5: #{tpu_custom_call.1} parent=1 // pred_fallthru
      _
    // Predicated region
    $region6: #{tpu_custom_call.1} parent=1 // pred_check
      _
    $region7: #{tpu_custom_call.1} parent=1 // pred_check_branch
      %20 = sbr.rel (0) target = $region9
    $region8: #{tpu_custom_call.1} parent=1 // pred_region
      _
    $region9: #{tpu_custom_call.1} parent=1 // pred_fallthru
      _
    // Predicated region
    $region10: #{tpu_custom_call.1} parent=1 // pred_check
      _
    $region11: #{tpu_custom_call.1} parent=1 // pred_check_branch
      %22 = sbr.rel (0) target = $region13
    $region12: #{tpu_custom_call.1} parent=1 // pred_region
      %23 = dma.done [#allocation3], 16
    $region13: #{tpu_custom_call.1} parent=1 // pred_fallthru
      _
    %v24 = vld [vmem:[#allocation2] sm:$0x1]
    %v25 = vld [vmem:[%s1] sm:$0x1]
    %v26 = vsub.f32 %v24, %v25
    %v27 = vand.u32 2147483647, %v26
    %vm28 = vcmask 57344
    %v29 = vsel %vm28, %v27, 0.0
    %30 = vadd.xlane.f32.xlu0 %v29
    %v31 = vpop.xlane.xlu0 %30
    %v32 = vrot.slane %v31, 4
    %v33 = vadd.f32 %v31, %v32
    %v34 = vrot.slane %v33, 2
    %v35 = vadd.f32 %v33, %v34
    %v36 = vrot.slane %v35, 1
    %v37 = vadd.f32 %v35, %v36
    %s38 = vtos %v37
    %v39 = vrcp.pop 8.0
    %s40 = vtos %v39
    %s41 = smul.f32 %s38, %s40
    %s42 = scalar_lea.smem [#allocation5], 0
    %43 = sst [smem:[%s42]] %s41
    // Predicated region
    $region14: #{tpu_custom_call.1} parent=1 // pred_check
      _
    $region15: #{tpu_custom_call.1} parent=1 // pred_check_branch
      %45 = sbr.rel (0) target = $region17
    $region16: #{tpu_custom_call.1} parent=1 // pred_region
      %s47 = ssub.s32 16, 16
      %48 = vsyncadd [#allocation4], %s47
      %51 = dma.smem_to_hbm [#allocation5], 16, %s2, [#allocation4]
    $region17: #{tpu_custom_call.1} parent=1 // pred_fallthru
      _
    // Predicated region
    $region18: #{tpu_custom_call.1} parent=1 // pred_check
      _
    $region19: #{tpu_custom_call.1} parent=1 // pred_check_branch
      %53 = sbr.rel (0) target = $region21
    $region20: #{tpu_custom_call.1} parent=1 // pred_region
      %54 = dma.done [#allocation4], 16
    $region21: #{tpu_custom_call.1} parent=1 // pred_fallthru
      _
    %55 = sfence
    %56 = vsyncpa [#allocation3], 1
    %57 = vsyncpa [#allocation4], 1

</llo_original>
